<compile_context>
chip_gen: v6e
topology: v6e:2x2x1
jax: 0.10.0
libtpu: 0.0.40
codegen_flags: <defaults>
</compile_context>

<pallas_src>
import functools

import jax
import jax.numpy as jnp
from jax.experimental import pallas as pl
from jax.experimental.pallas import tpu as pltpu

EPS = 1e-12  # matches torch.nn.functional.normalize default eps
_LANES = 384  # lcm(6, 128): 64 rays x 6 channels per lane-row


def _round_up(x, m):
    return (x + m - 1) // m * m


@functools.lru_cache(maxsize=None)
def _roll_sign():
    """Return +1 if pltpu.roll matches jnp.roll (out[l] = in[l - shift]), else -1."""
    def probe(x_ref, o_ref):
        o_ref[...] = pltpu.roll(x_ref[...], 1, axis=1)

    with jax.ensure_compile_time_eval():
        x = jnp.broadcast_to(jnp.arange(128, dtype=jnp.float32), (8, 128))
        y = pl.pallas_call(
            probe, out_shape=jax.ShapeDtypeStruct((8, 128), jnp.float32)
        )(x)
        y = jax.device_get(y)
    # jnp.roll convention: out[0, 1] == in[0, 0] == 0.
    return 1 if float(y[0, 1]) == 0.0 else -1


@functools.lru_cache(maxsize=None)
def _make_pluecker_kernel(roll_sign):
    """Kernel on a (TM, 384) interleaved block: [o(3), d(3)] x 64 rays per row."""

    def kernel(x_ref, o_ref):
        x = x_ref[...].astype(jnp.float32)          # (TM, 384)
        tm, nl = x.shape

        def rcv(v, k):
            # Array whose lane l holds v[..., (l - k) % nl] of the same row.
            s = (roll_sign * k) % nl
            return pltpu.roll(v, s, axis=1) if s else v

        # Channel id (lane % 6) built without vector integer div/rem:
        # exact for lane < 384 in f32.
        lane = jax.lax.broadcasted_iota(jnp.int32, (1, nl), 1).astype(jnp.float32)
        ch1 = lane - 6.0 * jnp.floor(lane * (1.0 / 6.0))      # (1, nl)
        ch = jnp.broadcast_to(ch1, (tm, nl))
        is3 = ch == 3.0
        is4 = ch == 4.0
        is5 = ch == 5.0
        low = ch < 2.5                               # channels 0,1,2 -> d_hat slots

        # Rolled copies of x (value at lane l):
        xm2 = rcv(x, -2)    # x[l+2]
        xm1 = rcv(x, -1)    # x[l+1]
        xp1 = rcv(x, 1)     # x[l-1]
        xp2 = rcv(x, 2)     # x[l-2]
        xp4 = rcv(x, 4)     # x[l-4]
        xp5 = rcv(x, 5)     # x[l-5]

        # ||d||^2 assembled at the m-lanes (channels 3,4,5) of each ray.
        sq0, sqm1, sqm2 = x * x, xm1 * xm1, xm2 * xm2
        sqp1, sqp2 = xp1 * xp1, xp2 * xp2
        n3 = sq0 + sqm1 + sqm2          # valid at ch==3
        n4 = sqp1 + sq0 + sqm1          # valid at ch==4
        n5 = sqp2 + sqp1 + sq0          # valid at ch==5
        nrm = jnp.where(is3, n3, jnp.where(is4, n4, n5))
        # d / max(||d||, eps) == d * rsqrt(max(||d||^2, eps^2))  (rsqrt -> EUP).
        inv = jax.lax.rsqrt(jnp.maximum(nrm, EPS * EPS))   # valid at ch 3..5

        # Normalized direction, aligned at the d lanes (ch 3..5);
        # shift down 3 lanes for the output's channels 0..2.
        dh = x * inv
        out_low = rcv(dh, -3)

        # m = o x d_hat at lanes ch 3..5 (i = ch - 3):
        #   o[i+1]: xp2 (i=0,1) / xp5 (i=2)
        #   d[i+2]: xm2 (i=0)   / xp1 (i=1,2)
        #   o[i+2]: xp1 (i=0)   / xp4 (i=1,2)
        #   d[i+1]: xm1 (i=0,1) / xp2 (i=2)
        o_a = jnp.where(is5, xp5, xp2)
        d_b = jnp.where(is3, xm2, xp1)
        o_c = jnp.where(is3, xp1, xp4)
        d_d = jnp.where(is5, xp2, xm1)
        out_m = (o_a * d_b - o_c * d_d) * inv

        # Single unmasked full-width store.
        o_ref[...] = jnp.where(low, out_low, out_m).astype(o_ref.dtype)

    return kernel


def ray_param_pluecker_pallas(rays, *, rows_per_block=3072, interpret=False):
    """Pluecker ray parametrization via Pallas.

    rays: [..., 6] = [origin(3), direction(3)] -> [..., 6] = [d_hat, o x d_hat]
    """
    orig_shape = rays.shape
    assert orig_shape[-1] == 6, "expected rays of shape [..., 6] = [origin, dir]"
    x = rays.reshape(-1, 6)                         # row-major: no data movement
    n = x.shape[0]

    # Lane-dense view needs a multiple of 64 rays per 384-lane row.
    pad = (-n) % 64
    if pad:
        x = jnp.pad(x, ((0, pad), (0, 0)))          # zero rays -> zero outputs
    n_pad = n + pad
    xw = x.reshape(n_pad // 64, _LANES)
    m_rows = xw.shape[0]

    itemsize = jnp.dtype(rays.dtype).itemsize
    sub = 16 if itemsize == 2 else 8                # bf16 packs 2 rows / sublane
    # Big tiles amortize the ~0.35us/step overhead; cap at half the rows so the
    # grid has >=2 steps (keeps both v7x TensorCores busy; no-op on v5e/v6e).
    half_rows = (m_rows + 1) // 2
    tm = max(sub, min(_round_up(rows_per_block, sub), _round_up(half_rows, sub)))
    grid = (pl.cdiv(m_rows, tm),)                   # ragged last block is masked

    block_bytes = tm * _LANES * itemsize
    # in+out, double-buffered, plus headroom; stays under v7x's 64 MiB VMEM.
    vmem_limit = int(min(48 * 2**20, max(32 * 2**20, 6 * block_bytes)))

    out = pl.pallas_call(
        _make_pluecker_kernel(_roll_sign()),
        out_shape=jax.ShapeDtypeStruct((m_rows, _LANES), rays.dtype),
        grid=grid,
        in_specs=[pl.BlockSpec((tm, _LANES), lambda i: (i, 0))],
        out_specs=pl.BlockSpec((tm, _LANES), lambda i: (i, 0)),
        compiler_params=pltpu.CompilerParams(
            dimension_semantics=("parallel",),
            vmem_limit_bytes=vmem_limit,
        ),
        interpret=interpret,
    )(xw)

    out = out.reshape(n_pad, 6)
    if pad:
        out = out[:n]
    return out.reshape(orig_shape)


def _pluecker_jnp(rays):
    """Pure-jnp reference / small-problem fast path."""
    o = rays[..., 0:3]
    d = rays[..., 3:6]
    d = d / jnp.maximum(jnp.linalg.norm(d, axis=-1, keepdims=True), EPS)
    return jnp.concatenate([d, jnp.cross(o, d)], axis=-1)


class RayParam:
    """JAX/Pallas port of nlf.embedding.RayParam (cfg.fn='pluecker', n_dims=6)."""

    def __init__(self, in_channels=6, n_dims=6, *, rows_per_block=3072,
                 pallas_min_rays=2048):
        self.in_channels = in_channels
        self.out_channels = n_dims
        self.rows_per_block = rows_per_block
        self.pallas_min_rays = pallas_min_rays
        # nn.Linear(1, 1) dummy layer: deterministic init, unused in forward.
        kw, kb = jax.random.split(jax.random.PRNGKey(42))
        self.dummy_w = jax.random.uniform(kw, (1, 1), minval=-1.0, maxval=1.0)
        self.dummy_b = jax.random.uniform(kb, (1,), minval=-1.0, maxval=1.0)
        self.cur_iter = 0

    def __call__(self, x):
        n_rays = x.size // x.shape[-1]
        if n_rays < self.pallas_min_rays:
            # Kernel-launch + padding overhead dominates tiny problems.
            return _pluecker_jnp(x)
        return ray_param_pluecker_pallas(x, rows_per_block=self.rows_per_block)

    def set_iter(self, i):
        self.cur_iter = i


if __name__ == "__main__":
    key = jax.random.PRNGKey(0)
    k1, k2, k3, k4 = jax.random.split(key, 4)

    # Case 1: small, 64-ray aligned batch (single grid step, partial block).
    rays = jax.random.normal(k1, (4, 128, 6), dtype=jnp.float32)
    out = jax.block_until_ready(ray_param_pluecker_pallas(rays))
    ref = _pluecker_jnp(rays)
    assert out.shape == rays.shape, out.shape
    assert jnp.allclose(out, ref, atol=1e-5, rtol=1e-5), \
        float(jnp.max(jnp.abs(out - ref)))

    # Case 2: larger batch -> >= 2 grid steps (pipelined, parallel axis).
    rays2 = jax.random.normal(k2, (2, 4096, 6), dtype=jnp.float32)
    out2 = jax.block_until_ready(ray_param_pluecker_pallas(rays2))
    ref2 = _pluecker_jnp(rays2)
    assert out2.shape == rays2.shape, out2.shape
    assert jnp.allclose(out2, ref2, atol=1e-5, rtol=1e-5), \
        float(jnp.max(jnp.abs(out2 - ref2)))

    # Case 3: ragged ray count (pads to a multiple of 64, slices back).
    rays3 = jax.random.normal(k3, (300, 6), dtype=jnp.float32)
    out3 = jax.block_until_ready(ray_param_pluecker_pallas(rays3))
    ref3 = _pluecker_jnp(rays3)
    assert out3.shape == rays3.shape, out3.shape
    assert jnp.allclose(out3, ref3, atol=1e-5, rtol=1e-5), \
        float(jnp.max(jnp.abs(out3 - ref3)))

    # Case 4: bf16 path (f32 compute in-kernel, single bf16 store).
    rays4 = jax.random.normal(k4, (2, 192, 6), dtype=jnp.float32).astype(jnp.bfloat16)
    out4 = jax.block_until_ready(ray_param_pluecker_pallas(rays4))
    ref4 = _pluecker_jnp(rays4.astype(jnp.float32))
    assert jnp.allclose(out4.astype(jnp.float32), ref4, atol=5e-2, rtol=2e-2)

    # Module wrapper path (>= pallas_min_rays -> Pallas kernel).
    mod = RayParam(in_channels=6, n_dims=6)
    out5 = jax.block_until_ready(mod(rays2))
    assert jnp.allclose(out5, ref2, atol=1e-5, rtol=1e-5)

    print("KERNEL_OK")
</pallas_src>

<mosaic_0001>
module attributes {stable_mosaic.version = 11 : i64} {
  func.func @probe(%arg0: memref<8x128xf32, #tpu.memory_space<vmem>>, %arg1: memref<8x128xf32, #tpu.memory_space<vmem>>) attributes {dimension_semantics = [], scalar_prefetch = 0 : i64, scratch_operands = 0 : i64, tpu.core_type = #tpu.core_type<tc>} {
    %c0 = arith.constant 0 : index
    %c0_0 = arith.constant 0 : index
    %0 = vector.load %arg0[%c0, %c0_0] : memref<8x128xf32, #tpu.memory_space<vmem>>, vector<8x128xf32>
    %c1_i32 = arith.constant 1 : i32
    %1 = tpu.dynamic_rotate %0 by %c1_i32 dim 1 : vector<8x128xf32>, i32 -> vector<8x128xf32>
    %c0_1 = arith.constant 0 : index
    %c0_2 = arith.constant 0 : index
    %2 = vector.load %arg1[%c0_1, %c0_2] : memref<8x128xf32, #tpu.memory_space<vmem>>, vector<8x128xf32>
    tpu.vector_store %arg1[%c0_1, %c0_2], %1 {strides = array<i32>} : memref<8x128xf32, #tpu.memory_space<vmem>>, vector<8x128xf32>,
    return
  }
}

</mosaic_0001>

<llo_original>
// kernel: tpu_custom_call.1
$region0: #{tpu_custom_call.1}
  #allocation0 [shape = 'u32[]', space=smem, size = 0x4, offset = 0x4, fixed_abs, tag = 'smem constant byte address 0x4 - core index']
  #allocation1 [shape = 'u32[144,128]{1,0:T(1,128)}', space=vmem, size = 0x12000, scoped, tag = 'internal scratch']
  %s0 = inlined_call_operand.hbm [shape: f32[8,128], index: 0, kind: input, shape index: {}]
  %s1 = inlined_call_operand.hbm [shape: f32[8,128], index: 1, kind: output, shape index: {}]
  %s2 = sld [smem:[#allocation0]]
  $region18: #{tpu_custom_call.1} parent=0
    _
  %s4 = ssub.s32 1, %s2
  %s5 = scalar_select 0, %s4, %s2
  $region1: #{tpu_custom_call.1} parent=0
    #allocation2 [shape = 'u8[4096]{0}', space=vmem, size = 0x1000, scoped, tag = 'input window, operand 0, single buffered']
    #allocation3 [shape = 's32[1]{0}', space=sflag, size = 0x4, scoped, tag = 'scoped memory for tpu_custom_call.1']
    #allocation4 [shape = 's32[1]{0}', space=sflag, size = 0x4, scoped, tag = 'scoped memory for tpu_custom_call.1']
    #allocation5 [shape = 'u8[4096]{0}', space=vmem, size = 0x1000, scoped, tag = 'output window, operand 0, single buffered']
    %6 = vsyncpa [#allocation3], 0
    %7 = vsyncpa [#allocation4], 0
    // Predicated region
    $region2: #{tpu_custom_call.1} parent=1 // pred_check
      _
    $region3: #{tpu_custom_call.1} parent=1 // pred_check_branch
      %9 = sbr.rel (0) target = $region5
    $region4: #{tpu_custom_call.1} parent=1 // pred_region
      %s11 = ssub.s32 128, 128
      %12 = vsyncadd [#allocation3], %s11
      %s14 = sshll.u32 [#allocation2], 4
      %s15 = int_to_ptr.vmem [resolvable:$true] %s14
      %17 = dma.hbm_to_vmem [thread:$0]  %s0, 128, %s15, [#allocation3]
    $region5: #{tpu_custom_call.1} parent=1 // pred_fallthru
      _
    // Predicated region
    $region6: #{tpu_custom_call.1} parent=1 // pred_check
      _
    $region7: #{tpu_custom_call.1} parent=1 // pred_check_branch
      %19 = sbr.rel (0) target = $region9
    $region8: #{tpu_custom_call.1} parent=1 // pred_region
      %20 = dma.done [#allocation3], 128
    $region9: #{tpu_custom_call.1} parent=1 // pred_fallthru
      _
    %v21 = vld [vmem:[#allocation2] sm:$0xff]
    %22 = vrot.lane.b32.xlu0 %v21, 1
    %v23 = vpop.permute.xlu0 %22
    %24 = vst [vmem:[#allocation5] sm:$0xff] %v23
    // Predicated region
    $region10: #{tpu_custom_call.1} parent=1 // pred_check
      _
    $region11: #{tpu_custom_call.1} parent=1 // pred_check_branch
      %26 = sbr.rel (0) target = $region13
    $region12: #{tpu_custom_call.1} parent=1 // pred_region
      %s28 = ssub.s32 128, 128
      %29 = vsyncadd [#allocation4], %s28
      %s31 = sshll.u32 [#allocation5], 4
      %s32 = int_to_ptr.vmem [resolvable:$true] %s31
      %34 = dma.vmem_to_hbm [thread:$0]  %s32, 128, %s1, [#allocation4]
    $region13: #{tpu_custom_call.1} parent=1 // pred_fallthru
      _
    // Predicated region
    $region14: #{tpu_custom_call.1} parent=1 // pred_check
      _
    $region15: #{tpu_custom_call.1} parent=1 // pred_check_branch
      %36 = sbr.rel (0) target = $region17
    $region16: #{tpu_custom_call.1} parent=1 // pred_region
      %37 = dma.done [#allocation4], 128
    $region17: #{tpu_custom_call.1} parent=1 // pred_fallthru
      _
    %38 = vsyncpa [#allocation3], 1
    %39 = vsyncpa [#allocation4], 1

</llo_original>
